<compile_context>
chip_gen: v7x
topology: tpu7x:2x2x1
jax: 0.10.0
libtpu: 0.0.40
codegen_flags: <defaults>
</compile_context>

<pallas_src>
import math
import jax
import jax.numpy as jnp
from jax.experimental import pallas as pl
from jax.experimental.pallas import tpu as pltpu

_LANE = 128      # last-dim tiling unit
_SUBLANE = 8     # second-to-last-dim tiling unit (f32)


def _round_up(x, m):
    return ((x + m - 1) // m) * m


def _linear_relu_kernel(x_ref, w_ref, b_ref, o_ref):
    """One (tm, tn) output tile; K is the innermost grid axis.

    The output block index_map ignores k, so the f32 output block stays
    resident in VMEM across the K reduction: accumulate directly into it.
    Bias is folded into the k==0 init; ReLU applied at the last K step.
    """
    k = pl.program_id(2)

    @pl.when(k == 0)
    def _init():
        o_ref[...] = jnp.broadcast_to(b_ref[...], o_ref.shape)

    o_ref[...] += jnp.dot(
        x_ref[...], w_ref[...], preferred_element_type=jnp.float32
    )

    @pl.when(k == pl.num_programs(2) - 1)
    def _finalize():
        o_ref[...] = jnp.maximum(o_ref[...], 0.0)


def prepare_linear_params(w, b, *, tn_max=512, tk_max=512):
    """Pad weight/bias ONCE (outside the per-call hot path) to tile multiples.

    w: (In, Out) f32, b: (Out,) or (1, Out) f32.
    Returns padded params plus the tile sizes used for padding.
    """
    In, Out = w.shape
    b = jnp.asarray(b).reshape(1, Out)
    tk = min(tk_max, _round_up(In, _LANE))    # multiple of 128
    tn = min(tn_max, _round_up(Out, _LANE))   # multiple of 128
    Inp = _round_up(In, tk)
    Outp = _round_up(Out, tn)
    wp = jnp.pad(w, ((0, Inp - In), (0, Outp - Out)))
    bp = jnp.pad(b, ((0, 0), (0, Outp - Out)))
    return dict(wp=wp, bp=bp, In=In, Out=Out, tn=tn, tk=tk)


def linear_relu(x, params, *, tm_max=256, vmem_budget_bytes=24 * 1024 * 1024):
    """y = relu(x @ W + b) using pre-padded params from prepare_linear_params."""
    wp, bp = params["wp"], params["bp"]
    In, Out, tn, tk = params["In"], params["Out"], params["tn"], params["tk"]
    Inp, Outp = wp.shape
    B, In_x = x.shape
    assert In_x == In

    # Skinny-batch special case: collapse the M grid to one step when the
    # 8-aligned batch fits in a single tile; otherwise use tm_max.
    Bp8 = _round_up(B, _SUBLANE)
    tm = Bp8 if Bp8 <= max(tm_max, 512) else _round_up(tm_max, _SUBLANE)

    # VMEM budget: double-buffered x / w / out f32 tiles. Safety-net fallback to
    # small always-valid tiles (128 divides the pre-padded dims) if a caller
    # requests something huge. Defaults stay ~4 MiB, far under 24 MiB.
    def _vmem_bytes(tm_, tn_, tk_):
        return 4 * 2 * (tm_ * tk_ + tk_ * tn_ + tm_ * tn_)

    if _vmem_bytes(tm, tn, tk) > vmem_budget_bytes:
        tn = _LANE
        tk = _LANE
        tm = min(tm, 256)

    Bp = _round_up(B, tm)
    # Only the (cheap) activation is padded per call; weights were padded once.
    xp = jnp.pad(x, ((0, Bp - B), (0, Inp - In)))

    grid = (Bp // tm, Outp // tn, Inp // tk)   # K innermost (reduction axis)

    out = pl.pallas_call(
        _linear_relu_kernel,
        out_shape=jax.ShapeDtypeStruct((Bp, Outp), jnp.float32),
        grid_spec=pltpu.PrefetchScalarGridSpec(
            num_scalar_prefetch=0,
            grid=grid,
            in_specs=[
                pl.BlockSpec((tm, tk), lambda i, j, k: (i, k)),   # x tile
                pl.BlockSpec((tk, tn), lambda i, j, k: (k, j)),   # w tile
                pl.BlockSpec((1, tn), lambda i, j, k: (0, j)),    # bias slice
            ],
            out_specs=pl.BlockSpec((tm, tn), lambda i, j, k: (i, j)),
        ),
        compiler_params=pltpu.CompilerParams(
            dimension_semantics=("parallel", "parallel", "arbitrary"),
            vmem_limit_bytes=32 * 1024 * 1024,
        ),
    )(xp, wp, bp)

    return out[:B, :Out]


def _make_params(key, in_features, out_features):
    """torch.nn.Linear-style uniform(-1/sqrt(in), 1/sqrt(in)) init."""
    kw, kb = jax.random.split(key)
    bound = 1.0 / math.sqrt(in_features)
    w_torch_layout = jax.random.uniform(
        kw, (out_features, in_features), jnp.float32, -bound, bound
    )
    bias = jax.random.uniform(kb, (out_features,), jnp.float32, -bound, bound)
    # Kernel layout: (In, Out) weight, (Out,) bias.
    return w_torch_layout.T, bias


if __name__ == "__main__":
    key = jax.random.PRNGKey(0)
    k1, k2, k3, k4, k5, k6 = jax.random.split(key, 6)

    # --- 1) Module-implied shape: x1 = randn(1, 64) -> Linear -> ReLU -----------
    B1, In1, Out1 = 1, 64, 32
    w1, b1 = _make_params(k1, In1, Out1)
    p1 = prepare_linear_params(w1, b1)                 # pad weights once
    x1 = jax.random.normal(k2, (B1, In1), jnp.float32)

    y1 = linear_relu(x1, p1)
    jax.block_until_ready(y1)
    ref1 = jnp.maximum(x1 @ w1 + b1[None, :], 0.0)
    assert y1.shape == (B1, Out1)
    assert jnp.allclose(y1, ref1, atol=1e-5, rtol=1e-5)

    # --- 2) Force a multi-tile (N, K) grid to exercise init/accumulate/finalize --
    B2, In2, Out2 = 24, 384, 256
    w2, b2 = _make_params(k3, In2, Out2)
    p2 = prepare_linear_params(w2, b2, tn_max=128, tk_max=128)   # grid (1, 2, 3)
    x2 = jax.random.normal(k4, (B2, In2), jnp.float32)

    y2 = linear_relu(x2, p2)
    jax.block_until_ready(y2)
    ref2 = jnp.maximum(x2 @ w2 + b2[None, :], 0.0)
    assert y2.shape == (B2, Out2)
    assert jnp.allclose(y2, ref2, atol=1e-4, rtol=1e-4)

    # --- 3) Larger shape on the default (big-tile) path --------------------------
    B3, In3, Out3 = 256, 512, 384
    w3, b3 = _make_params(k5, In3, Out3)
    p3 = prepare_linear_params(w3, b3)
    x3 = jax.random.normal(k6, (B3, In3), jnp.float32)

    y3 = linear_relu(x3, p3)
    jax.block_until_ready(y3)
    ref3 = jnp.maximum(x3 @ w3 + b3[None, :], 0.0)
    assert y3.shape == (B3, Out3)
    assert jnp.allclose(y3, ref3, atol=1e-4, rtol=1e-4)

    print("KERNEL_OK")
</pallas_src>

<mosaic_0001>
module attributes {stable_mosaic.version = 11 : i64} {
  func.func @_linear_relu_kernel(%arg0: i32, %arg1: i32, %arg2: i32, %arg3: memref<8x128xf32, #tpu.memory_space<vmem>>, %arg4: memref<128x128xf32, #tpu.memory_space<vmem>>, %arg5: memref<1x128xf32, #tpu.memory_space<vmem>>, %arg6: memref<8x128xf32, #tpu.memory_space<vmem>>) attributes {dimension_semantics = [#tpu.dimension_semantics<parallel>, #tpu.dimension_semantics<parallel>, #tpu.dimension_semantics<arbitrary>], iteration_bounds = array<i64: 1, 1, 1>, scalar_prefetch = 0 : i64, scratch_operands = 0 : i64, tpu.core_type = #tpu.core_type<tc>, window_params = [{transform_indices = @transform_0, window_bounds = array<i64: 8, 128>}, {transform_indices = @transform_1, window_bounds = array<i64: 128, 128>}, {transform_indices = @transform_2, window_bounds = array<i64: 1, 128>}, {transform_indices = @transform_3, window_bounds = array<i64: 8, 128>}]} {
    %c0_i32 = arith.constant 0 : i32
    %0 = arith.cmpi eq, %arg2, %c0_i32 : i32
    %1 = arith.extui %0 : i1 to i32
    %c0_i32_0 = arith.constant 0 : i32
    %2 = arith.cmpi ne, %1, %c0_i32_0 : i32
    scf.if %2 {
      %c0_10 = arith.constant 0 : index
      %c0_11 = arith.constant 0 : index
      %12 = vector.load %arg5[%c0_10, %c0_11] : memref<1x128xf32, #tpu.memory_space<vmem>>, vector<1x128xf32>
      %13 = vector.shape_cast %12 : vector<1x128xf32> to vector<1x128xf32>
      %14 = vector.broadcast %13 : vector<1x128xf32> to vector<8x128xf32>
      %c0_12 = arith.constant 0 : index
      %c0_13 = arith.constant 0 : index
      %15 = vector.load %arg6[%c0_12, %c0_13] : memref<8x128xf32, #tpu.memory_space<vmem>>, vector<8x128xf32>
      tpu.vector_store %arg6[%c0_12, %c0_13], %14 {strides = array<i32>} : memref<8x128xf32, #tpu.memory_space<vmem>>, vector<8x128xf32>,
    } else {
    }
    %c0 = arith.constant 0 : index
    %c0_1 = arith.constant 0 : index
    %3 = vector.load %arg6[%c0, %c0_1] : memref<8x128xf32, #tpu.memory_space<vmem>>, vector<8x128xf32>
    %c0_2 = arith.constant 0 : index
    %c0_3 = arith.constant 0 : index
    %4 = vector.load %arg3[%c0_2, %c0_3] : memref<8x128xf32, #tpu.memory_space<vmem>>, vector<8x128xf32>
    %c0_4 = arith.constant 0 : index
    %c0_5 = arith.constant 0 : index
    %5 = vector.load %arg4[%c0_4, %c0_5] : memref<128x128xf32, #tpu.memory_space<vmem>>, vector<128x128xf32>
    %cst = arith.constant dense<0.000000e+00> : vector<8x128xf32>
    %6 = tpu.matmul %4, %5, %cst {dimension_numbers = #tpu.dot_dimension_numbers<[1], [0], [0], [1], [0, 0, 1, 1], [], []>} : vector<8x128xf32>, vector<128x128xf32>, vector<8x128xf32> -> vector<8x128xf32>
    %7 = arith.addf %3, %6 : vector<8x128xf32>
    %c0_6 = arith.constant 0 : index
    %c0_7 = arith.constant 0 : index
    %8 = vector.load %arg6[%c0_6, %c0_7] : memref<8x128xf32, #tpu.memory_space<vmem>>, vector<8x128xf32>
    tpu.vector_store %arg6[%c0_6, %c0_7], %7 {strides = array<i32>} : memref<8x128xf32, #tpu.memory_space<vmem>>, vector<8x128xf32>,
    %c0_i32_8 = arith.constant 0 : i32
    %9 = arith.cmpi eq, %arg2, %c0_i32_8 : i32
    %10 = arith.extui %9 : i1 to i32
    %c0_i32_9 = arith.constant 0 : i32
    %11 = arith.cmpi ne, %10, %c0_i32_9 : i32
    scf.if %11 {
      %c0_10 = arith.constant 0 : index
      %c0_11 = arith.constant 0 : index
      %12 = vector.load %arg6[%c0_10, %c0_11] : memref<8x128xf32, #tpu.memory_space<vmem>>, vector<8x128xf32>
      %cst_12 = arith.constant 0.000000e+00 : f32
      %13 = vector.broadcast %cst_12 : f32 to vector<8x128xf32>
      %14 = arith.maximumf %12, %13 : vector<8x128xf32>
      %c0_13 = arith.constant 0 : index
      %c0_14 = arith.constant 0 : index
      %15 = vector.load %arg6[%c0_13, %c0_14] : memref<8x128xf32, #tpu.memory_space<vmem>>, vector<8x128xf32>
      tpu.vector_store %arg6[%c0_13, %c0_14], %14 {strides = array<i32>} : memref<8x128xf32, #tpu.memory_space<vmem>>, vector<8x128xf32>,
    } else {
    }
    return
  }
  func.func @transform_0(%arg0: i32, %arg1: i32, %arg2: i32) -> (i32, i32) {
    %c0_i32 = arith.constant 0 : i32
    return %arg0, %arg2 : i32, i32
  }
  func.func @transform_1(%arg0: i32, %arg1: i32, %arg2: i32) -> (i32, i32) {
    %c0_i32 = arith.constant 0 : i32
    return %arg2, %arg1 : i32, i32
  }
  func.func @transform_2(%arg0: i32, %arg1: i32, %arg2: i32) -> (i32, i32) {
    %c0_i32 = arith.constant 0 : i32
    %c0_i32_0 = arith.constant 0 : i32
    return %c0_i32, %arg1 : i32, i32
  }
  func.func @transform_3(%arg0: i32, %arg1: i32, %arg2: i32) -> (i32, i32) {
    %c0_i32 = arith.constant 0 : i32
    return %arg0, %arg1 : i32, i32
  }
}

</mosaic_0001>

<llo_original>
// kernel: tpu_custom_call.1
$region0: #{tpu_custom_call.1}
  #allocation0 [shape = 'u32[]', space=smem, size = 0x4, offset = 0x4, fixed_abs, tag = 'smem constant byte address 0x4 - core index']
  #allocation1 [shape = 'u32[144,128]{1,0:T(1,128)}', space=vmem, size = 0x12000, scoped, tag = 'internal scratch']
  %s0 = inlined_call_operand.hbm [shape: f32[8,128], index: 0, kind: input, shape index: {}]
  %s1 = inlined_call_operand.hbm [shape: f32[128,128], index: 1, kind: input, shape index: {}]
  %s2 = inlined_call_operand.vmem [shape: f32[1,128], index: 2, kind: input, shape index: {}]
  %s3 = inlined_call_operand.hbm [shape: f32[8,128], index: 3, kind: output, shape index: {}]
  %s4 = sld [smem:[#allocation0]]
  $region38: #{tpu_custom_call.1} parent=0
    _
  %s6 = ssub.s32 1, %s4
  %s7 = scalar_select 0, %s6, %s4
  $region1: #{tpu_custom_call.1} parent=0
    #allocation2 [shape = 'u8[4096]{0}', space=vmem, size = 0x1000, scoped, tag = 'input window, operand 0, single buffered']
    #allocation3 [shape = 's32[1]{0}', space=sflag, size = 0x4, scoped, tag = 'scoped memory for tpu_custom_call.1']
    #allocation4 [shape = 's32[1]{0}', space=sflag, size = 0x4, scoped, tag = 'scoped memory for tpu_custom_call.1']
    #allocation5 [shape = 'u8[65536]{0}', space=vmem, size = 0x10000, scoped, tag = 'input window, operand 1, single buffered']
    #allocation6 [shape = 's32[1]{0}', space=sflag, size = 0x4, scoped, tag = 'scoped memory for tpu_custom_call.1']
    #allocation7 [shape = 'u8[4096]{0}', space=vmem, size = 0x1000, scoped, tag = 'output window, operand 0, single buffered']
    %8 = vsyncpa [#allocation3], 0
    %9 = vsyncpa [#allocation6], 0
    %10 = vsyncpa [#allocation4], 0
    // Predicated region
    $region2: #{tpu_custom_call.1} parent=1 // pred_check
      _
    $region3: #{tpu_custom_call.1} parent=1 // pred_check_branch
      %12 = sbr.rel (0) target = $region5
    $region4: #{tpu_custom_call.1} parent=1 // pred_region
      %s14 = ssub.s32 128, 128
      %15 = vsyncadd [#allocation3], %s14
      %s17 = sshll.u32 [#allocation2], 4
      %s18 = int_to_ptr.vmem [resolvable:$true] %s17
      %20 = dma.hbm_to_vmem [thread:$0]  %s0, 128, %s18, [#allocation3]
    $region5: #{tpu_custom_call.1} parent=1 // pred_fallthru
      _
    // Predicated region
    $region6: #{tpu_custom_call.1} parent=1 // pred_check
      _
    $region7: #{tpu_custom_call.1} parent=1 // pred_check_branch
      %22 = sbr.rel (0) target = $region9
    $region8: #{tpu_custom_call.1} parent=1 // pred_region
      %s24 = ssub.s32 2048, 2048
      %25 = vsyncadd [#allocation6], %s24
      %s26 = sshll.u32 [#allocation5], 4
      %s27 = int_to_ptr.vmem [resolvable:$true] %s26
      %32 = dma.hbm_to_vmem [thread:$0]  %s1, 2048, %s27, [#allocation6], 128, 128, 8
    $region9: #{tpu_custom_call.1} parent=1 // pred_fallthru
      _
    // Predicated region
    $region10: #{tpu_custom_call.1} parent=1 // pred_check
      _
    $region11: #{tpu_custom_call.1} parent=1 // pred_check_branch
      %34 = sbr.rel (0) target = $region13
    $region12: #{tpu_custom_call.1} parent=1 // pred_region
      _
    $region13: #{tpu_custom_call.1} parent=1 // pred_fallthru
      _
    // Predicated region
    $region14: #{tpu_custom_call.1} parent=1 // pred_check
      _
    $region15: #{tpu_custom_call.1} parent=1 // pred_check_branch
      %36 = sbr.rel (0) target = $region17
    $region16: #{tpu_custom_call.1} parent=1 // pred_region
      %37 = dma.done [#allocation3], 128
    $region17: #{tpu_custom_call.1} parent=1 // pred_fallthru
      _
    // Predicated region
    $region18: #{tpu_custom_call.1} parent=1 // pred_check
      _
    $region19: #{tpu_custom_call.1} parent=1 // pred_check_branch
      %39 = sbr.rel (0) target = $region21
    $region20: #{tpu_custom_call.1} parent=1 // pred_region
      %40 = dma.done [#allocation6], 2048
    $region21: #{tpu_custom_call.1} parent=1 // pred_fallthru
      _
    %p41 = scmp.eq.s32.totalorder 0, 0
    // Predicated region
    $region22: #{tpu_custom_call.1} parent=1 // pred_check
      %p42 = pneg %p41
    $region23: #{tpu_custom_call.1} parent=1 // pred_check_branch
      %44 = sbr.rel (%p42) target = $region25
    $region24: #{tpu_custom_call.1} parent=1 // pred_region
      %v45 = vld [vmem:[%s2] sm:$0x1]
      %v47 = vlaneseq
      %v48 = vshrl.u32 %v47, 7
      %v49 = vsub.s32 0, %v48
      %v50 = vrot.slane %v45, %v49
      %52 = vst [vmem:[#allocation7] sm:$0xff] %v50
    $region25: #{tpu_custom_call.1} parent=1 // pred_fallthru
      _
    %v53 = vld [vmem:[#allocation7] sm:$0xff]
    %v54 = vld [vmem:[#allocation2] sm:$0xff]
    %v55 = vld [vmem:[#allocation5] sm:$0xff]
    %v56 = vld [vmem:[#allocation5 + $0x8] sm:$0xff]
    %v57 = vld [vmem:[#allocation5 + $0x10] sm:$0xff]
    %v58 = vld [vmem:[#allocation5 + $0x18] sm:$0xff]
    %v59 = vld [vmem:[#allocation5 + $0x20] sm:$0xff]
    %v60 = vld [vmem:[#allocation5 + $0x28] sm:$0xff]
    %v61 = vld [vmem:[#allocation5 + $0x30] sm:$0xff]
    %v62 = vld [vmem:[#allocation5 + $0x38] sm:$0xff]
    %v63 = vld [vmem:[#allocation5 + $0x40] sm:$0xff]
    %v64 = vld [vmem:[#allocation5 + $0x48] sm:$0xff]
    %v65 = vld [vmem:[#allocation5 + $0x50] sm:$0xff]
    %v66 = vld [vmem:[#allocation5 + $0x58] sm:$0xff]
    %v67 = vld [vmem:[#allocation5 + $0x60] sm:$0xff]
    %v68 = vld [vmem:[#allocation5 + $0x68] sm:$0xff]
    %v69 = vld [vmem:[#allocation5 + $0x70] sm:$0xff]
    %v70 = vld [vmem:[#allocation5 + $0x78] sm:$0xff]
    %71 = vmatprep.subr.mxu0 0.0
    %72 = vmatpush1.msra.mxu0 %v55
    %73 = vmatprep.subr.mxu0 0.0
    %74 = vmatpush1.msra.mxu0 %v56
    %75 = vmatprep.subr.mxu0 0.0
    %76 = vmatpush1.msra.mxu0 %v57
    %77 = vmatprep.subr.mxu0 0.0
    %78 = vmatpush1.msra.mxu0 %v58
    %79 = vmatprep.subr.mxu0 0.0
    %80 = vmatpush1.msra.mxu0 %v59
    %81 = vmatprep.subr.mxu0 0.0
    %82 = vmatpush1.msra.mxu0 %v60
    %83 = vmatprep.subr.mxu0 0.0
    %84 = vmatpush1.msra.mxu0 %v61
    %85 = vmatprep.subr.mxu0 0.0
    %86 = vmatpush1.msra.mxu0 %v62
    %87 = vmatprep.subr.mxu0 0.0
    %88 = vmatpush1.msra.mxu0 %v63
    %89 = vmatprep.subr.mxu0 0.0
    %90 = vmatpush1.msra.mxu0 %v64
    %91 = vmatprep.subr.mxu0 0.0
    %92 = vmatpush1.msra.mxu0 %v65
    %93 = vmatprep.subr.mxu0 0.0
    %94 = vmatpush1.msra.mxu0 %v66
    %95 = vmatprep.subr.mxu0 0.0
    %96 = vmatpush1.msra.mxu0 %v67
    %97 = vmatprep.subr.mxu0 0.0
    %98 = vmatpush1.msra.mxu0 %v68
    %99 = vmatprep.subr.mxu0 0.0
    %100 = vmatpush1.msra.mxu0 %v69
    %101 = vmatprep.subr.mxu0 0.0
    %102 = vmatpush1.msra.mxu0 %v70
    %103 = vmatprep.subr.mxu0 0.0
    %104 = vmatpush1.msra.mxu0 0.0
    %105 = vmatprep.subr.mxu0 0.0
    %106 = vmatpush1.msra.mxu0 0.0
    %107 = vmatprep.subr.mxu0 0.0
    %108 = vmatpush1.msra.mxu0 0.0
    %109 = vmatprep.subr.mxu0 0.0
    %110 = vmatpush1.msra.mxu0 0.0
    %111 = vmatprep.subr.mxu0 0.0
    %112 = vmatpush1.msra.mxu0 0.0
    %113 = vmatprep.subr.mxu0 0.0
    %114 = vmatpush1.msra.mxu0 0.0
    %115 = vmatprep.subr.mxu0 0.0
    %116 = vmatpush1.msra.mxu0 0.0
    %117 = vmatprep.subr.mxu0 0.0
    %118 = vmatpush1.msra.mxu0 0.0
    %119 = vmatprep.subr.mxu0 0.0
    %120 = vmatpush1.msra.mxu0 0.0
    %121 = vmatprep.subr.mxu0 0.0
    %122 = vmatpush1.msra.mxu0 0.0
    %123 = vmatprep.subr.mxu0 0.0
    %124 = vmatpush1.msra.mxu0 0.0
    %125 = vmatprep.subr.mxu0 0.0
    %126 = vmatpush1.msra.mxu0 0.0
    %127 = vmatprep.subr.mxu0 0.0
    %128 = vmatpush1.msra.mxu0 0.0
    %129 = vmatprep.subr.mxu0 0.0
    %130 = vmatpush1.msra.mxu0 0.0
    %131 = vmatprep.subr.mxu0 0.0
    %132 = vmatpush1.msra.mxu0 0.0
    %133 = vmatprep.subr.mxu0 0.0
    %134 = vmatpush1.msra.mxu0 0.0
    %135 = vmatprep.mubr.f32.mxu0 0.0
    %136 = vmatmul.mubr.f32.gmra.mrb[0].mxu0 %v54
    %v137 = vpop.f32.mrb[0].mxu0
    %v138 = vadd.f32 0.0, %v137
    %v139 = vpop.f32.mrb[0].mxu0
    %140 = vdwg.mxu0
    %v141 = vadd.f32 %v53, %v138
    %142 = vst [vmem:[#allocation7] sm:$0xff] %v141
    // Predicated region
    $region26: #{tpu_custom_call.1} parent=1 // pred_check
      %p143 = pneg %p41
    $region27: #{tpu_custom_call.1} parent=1 // pred_check_branch
      %145 = sbr.rel (%p143) target = $region29
    $region28: #{tpu_custom_call.1} parent=1 // pred_region
      %v146 = vld [vmem:[#allocation7] sm:$0xff]
      %v147 = vmax.f32 %v146, 0.0
      %148 = vst [vmem:[#allocation7] sm:$0xff] %v147
    $region29: #{tpu_custom_call.1} parent=1 // pred_fallthru
      _
    // Predicated region
    $region30: #{tpu_custom_call.1} parent=1 // pred_check
      _
    $region31: #{tpu_custom_call.1} parent=1 // pred_check_branch
      %150 = sbr.rel (0) target = $region33
    $region32: #{tpu_custom_call.1} parent=1 // pred_region
      %s152 = ssub.s32 128, 128
      %153 = vsyncadd [#allocation4], %s152
      %s155 = sshll.u32 [#allocation7], 4
      %s156 = int_to_ptr.vmem [resolvable:$true] %s155
      %158 = dma.vmem_to_hbm [thread:$0]  %s156, 128, %s3, [#allocation4]
    $region33: #{tpu_custom_call.1} parent=1 // pred_fallthru
      _
    // Predicated region
    $region34: #{tpu_custom_call.1} parent=1 // pred_check
      _
    $region35: #{tpu_custom_call.1} parent=1 // pred_check_branch
      %160 = sbr.rel (0) target = $region37
    $region36: #{tpu_custom_call.1} parent=1 // pred_region
      %161 = dma.done [#allocation4], 128
    $region37: #{tpu_custom_call.1} parent=1 // pred_fallthru
      _
    %162 = vsyncpa [#allocation3], 1
    %163 = vsyncpa [#allocation6], 1
    %164 = vsyncpa [#allocation4], 1

</llo_original>
